<compile_context>
chip_gen: v6e
topology: v6e:2x2x1
jax: 0.10.0
libtpu: 0.0.40
codegen_flags: <defaults>
</compile_context>

<pallas_src>
import jax
import jax.numpy as jnp
from jax.experimental import pallas as pl
from jax.experimental.pallas import tpu as pltpu

_LANES = 128
_MAX_TILE_ROWS = 2048            # (2048, 128) f32 tile = 1 MiB per buffer
_MIN_PALLAS_ELEMS = 8 * _LANES   # below one (8,128) tile, call overhead dominates
_SUBLANE_MULT = {1: 32, 2: 16, 4: 8, 8: 8}

_CORE_PARALLEL_OK = None  # lazily probed once


# --------------------------------------------------------------------------
# Kernels
# --------------------------------------------------------------------------
def _rsub_tensor_kernel(x_ref, y_ref, o_ref):
    # third = rsub(x, y) = y - x ; out = rsub(third, third) = third - third
    # Keep the subtraction (do NOT memset zeros) so NaN/Inf propagate like PyTorch.
    third = y_ref[...] - x_ref[...]
    o_ref[...] = (third - third).astype(o_ref.dtype)


def _rsub_scalar_kernel(s_ref, x_ref, o_ref):
    # out = rsub(x*x, s) = s - x*x ; s is a single 32-bit SMEM scalar.
    s = s_ref[0]
    x = x_ref[...]
    o_ref[...] = (s - x * x).astype(o_ref.dtype)


def _copy_kernel(x_ref, o_ref):
    o_ref[...] = x_ref[...]


# --------------------------------------------------------------------------
# Helpers
# --------------------------------------------------------------------------
def _core_parallel_supported():
    """Probe CORE_PARALLEL lowering once; cache the answer."""
    global _CORE_PARALLEL_OK
    if _CORE_PARALLEL_OK is not None:
        return _CORE_PARALLEL_OK
    try:
        x = jnp.arange(16 * _LANES, dtype=jnp.float32).reshape(16, _LANES)
        out = pl.pallas_call(
            _copy_kernel,
            out_shape=jax.ShapeDtypeStruct((16, _LANES), jnp.float32),
            grid=(2,),
            in_specs=[pl.BlockSpec((8, _LANES), lambda i: (i, 0))],
            out_specs=pl.BlockSpec((8, _LANES), lambda i: (i, 0)),
            compiler_params=pltpu.CompilerParams(
                dimension_semantics=(pltpu.CORE_PARALLEL,)),
        )(x)
        jax.block_until_ready(out)
        _CORE_PARALLEL_OK = bool(jnp.all(out == x))
    except Exception:
        _CORE_PARALLEL_OK = False
    return _CORE_PARALLEL_OK


def _pick_tile_rows(rows, dtype):
    """Sublane-aligned, dtype-aware tile height that prefers even division."""
    if rows <= _MAX_TILE_ROWS:
        return rows  # single block == full array: no alignment constraint, grid = 1
    sub = _SUBLANE_MULT.get(jnp.dtype(dtype).itemsize, 8)
    max_rows = (_MAX_TILE_ROWS // sub) * sub
    # Prefer a tile that divides `rows` evenly so the last block is not a
    # masked partial store (matters on v5e's single vector-store slot).
    for tr in range(max_rows, max_rows // 2 - 1, -sub):
        if rows % tr == 0:
            return tr
    return max_rows  # ragged last block; Pallas masks it correctly


def _row_tiled_call(kernel, out_dtype, x2d, vmem_args, smem_args=()):
    rows = x2d.shape[0]
    tr = _pick_tile_rows(rows, out_dtype)
    grid0 = pl.cdiv(rows, tr)
    tile_spec = pl.BlockSpec((tr, _LANES), lambda i: (i, 0))

    in_specs = ([pl.BlockSpec(memory_space=pltpu.MemorySpace.SMEM)] * len(smem_args)
                + [tile_spec] * len(vmem_args))

    # Shard the row grid across v7x's two TensorCores when there is more than
    # one tile; fall back to plain "parallel" otherwise (or if probing failed).
    sem = (pltpu.CORE_PARALLEL
           if (grid0 > 1 and _core_parallel_supported()) else "parallel")

    n_streams = len(vmem_args) + 1
    nbytes = x2d.size * jnp.dtype(out_dtype).itemsize
    return pl.pallas_call(
        kernel,
        out_shape=jax.ShapeDtypeStruct(x2d.shape, out_dtype),
        grid=(grid0,),
        in_specs=in_specs,
        out_specs=tile_spec,
        compiler_params=pltpu.CompilerParams(
            dimension_semantics=(sem,),
            vmem_limit_bytes=32 * 1024 * 1024),
        cost_estimate=pl.CostEstimate(
            flops=2 * x2d.size,
            transcendentals=0,
            bytes_accessed=n_streams * nbytes),
    )(*smem_args, *vmem_args)


# --------------------------------------------------------------------------
# Model
# --------------------------------------------------------------------------
def simple_rsub_model(tensor, other):
    """JAX/Pallas equivalent of SimpleRsubModel.forward."""
    tensor = jnp.asarray(tensor)
    other = jnp.asarray(other)

    if other.ndim == 0:
        # ---- scalar branch: other.item() - tensor * tensor ----------------
        out_dtype = tensor.dtype
        n = tensor.size
        if n < _MIN_PALLAS_ELEMS or n % _LANES != 0:
            # Tiny or ragged: one fused XLA pass beats pallas_call overhead /
            # pad+slice round-trips.
            return (other.astype(out_dtype) - tensor * tensor).astype(out_dtype)

        x2d = tensor.reshape(n // _LANES, _LANES)  # free metadata reshape
        if jnp.dtype(out_dtype).itemsize == 4:
            smem_dtype = out_dtype
        elif jnp.issubdtype(out_dtype, jnp.floating):
            smem_dtype = jnp.float32
        else:
            smem_dtype = jnp.int32
        scalar = other.astype(smem_dtype).reshape(1)  # 1-D: no SMEM slab padding
        out2d = _row_tiled_call(_rsub_scalar_kernel, out_dtype, x2d,
                                vmem_args=(x2d,), smem_args=(scalar,))
        return out2d.reshape(tensor.shape)

    # ---- tensor branch: third = other - tensor ; out = third - third ------
    out_shape = jnp.broadcast_shapes(tensor.shape, other.shape)
    out_dtype = jnp.result_type(tensor.dtype, other.dtype)
    mismatched = (tensor.shape != out_shape or other.shape != out_shape
                  or tensor.dtype != out_dtype or other.dtype != out_dtype)
    n = 1
    for d in out_shape:
        n *= int(d)

    if mismatched or n < _MIN_PALLAS_ELEMS or n % _LANES != 0:
        # Never materialize a broadcast in HBM; XLA fuses broadcast+sub+sub
        # into a single pass, which is optimal for this mem-bound op.
        # TODO(synk): an in-kernel broadcast via index_map is possible for
        # mismatched shapes but unnecessary for the test shapes.
        third = other.astype(out_dtype) - tensor.astype(out_dtype)
        return third - third

    x2d = tensor.reshape(n // _LANES, _LANES)  # free metadata reshapes
    y2d = other.reshape(n // _LANES, _LANES)
    out2d = _row_tiled_call(_rsub_tensor_kernel, out_dtype, x2d,
                            vmem_args=(x2d, y2d))
    return out2d.reshape(out_shape)


# --------------------------------------------------------------------------
# Demo / self-test
# --------------------------------------------------------------------------
if __name__ == "__main__":
    key = jax.random.PRNGKey(0)
    k1, k2, k3, k4, k5 = jax.random.split(key, 5)

    # 1) tensor-tensor branch at the torch_glow test shape (single-tile Pallas call)
    tensor = jax.random.normal(k1, (2, 4, 16, 16), dtype=jnp.float32)
    other = jax.random.normal(k2, (2, 4, 16, 16), dtype=jnp.float32)
    out = simple_rsub_model(tensor, other)
    jax.block_until_ready(out)
    ref = (other - tensor) - (other - tensor)
    assert out.shape == (2, 4, 16, 16)
    assert jnp.allclose(out, ref, atol=1e-6)

    # 2) scalar branch at the same shape
    scalar_other = jax.random.normal(k3, (), dtype=jnp.float32)
    out_s = simple_rsub_model(tensor, scalar_other)
    jax.block_until_ready(out_s)
    ref_s = scalar_other - tensor * tensor
    assert out_s.shape == (2, 4, 16, 16)
    assert jnp.allclose(out_s, ref_s, atol=1e-6)

    # 3) larger case: 4096 rows -> 2 tiles, exercises grid > 1 (CORE_PARALLEL on v7x)
    t_big = jax.random.normal(k4, (4, 8, 128, 128), dtype=jnp.float32)
    o_big = jax.random.normal(k5, (4, 8, 128, 128), dtype=jnp.float32)
    out_b = simple_rsub_model(t_big, o_big)
    out_sb = simple_rsub_model(t_big, scalar_other)
    jax.block_until_ready((out_b, out_sb))
    ref_b = (o_big - t_big) - (o_big - t_big)
    ref_sb = scalar_other - t_big * t_big
    assert out_b.shape == (4, 8, 128, 128)
    assert jnp.allclose(out_b, ref_b, atol=1e-6)
    assert jnp.allclose(out_sb, ref_sb, atol=1e-6)

    # 4) non-128-divisible numel exercises the fused-jnp fallback path
    t_odd = jax.random.normal(k1, (2, 3, 5, 7), dtype=jnp.float32)
    o_odd = jax.random.normal(k2, (2, 3, 5, 7), dtype=jnp.float32)
    out_o = simple_rsub_model(t_odd, o_odd)
    jax.block_until_ready(out_o)
    assert jnp.allclose(out_o, (o_odd - t_odd) - (o_odd - t_odd), atol=1e-6)

    print("KERNEL_OK")
</pallas_src>

<mosaic_0001>
module attributes {stable_mosaic.version = 11 : i64} {
  func.func @_rsub_tensor_kernel(%arg0: i32, %arg1: memref<16x128xf32, #tpu.memory_space<vmem>>, %arg2: memref<16x128xf32, #tpu.memory_space<vmem>>, %arg3: memref<16x128xf32, #tpu.memory_space<vmem>>) attributes {dimension_semantics = [#tpu.dimension_semantics<parallel>], iteration_bounds = array<i64: 1>, scalar_prefetch = 0 : i64, scratch_operands = 0 : i64, tpu.core_type = #tpu.core_type<tc>, window_params = [{transform_indices = @transform_0, window_bounds = array<i64: 16, 128>}, {transform_indices = @transform_1, window_bounds = array<i64: 16, 128>}, {transform_indices = @transform_2, window_bounds = array<i64: 16, 128>}]} {
    %c0 = arith.constant 0 : index
    %c0_0 = arith.constant 0 : index
    %0 = vector.load %arg2[%c0, %c0_0] : memref<16x128xf32, #tpu.memory_space<vmem>>, vector<16x128xf32>
    %c0_1 = arith.constant 0 : index
    %c0_2 = arith.constant 0 : index
    %1 = vector.load %arg1[%c0_1, %c0_2] : memref<16x128xf32, #tpu.memory_space<vmem>>, vector<16x128xf32>
    %2 = arith.subf %0, %1 : vector<16x128xf32>
    %3 = arith.subf %2, %2 : vector<16x128xf32>
    %c0_3 = arith.constant 0 : index
    %c0_4 = arith.constant 0 : index
    %4 = vector.load %arg3[%c0_3, %c0_4] : memref<16x128xf32, #tpu.memory_space<vmem>>, vector<16x128xf32>
    tpu.vector_store %arg3[%c0_3, %c0_4], %3 {strides = array<i32>} : memref<16x128xf32, #tpu.memory_space<vmem>>, vector<16x128xf32>,
    return
  }
  func.func @transform_0(%arg0: i32) -> (i32, i32) {
    %c0_i32 = arith.constant 0 : i32
    %c0_i32_0 = arith.constant 0 : i32
    return %arg0, %c0_i32 : i32, i32
  }
  func.func @transform_1(%arg0: i32) -> (i32, i32) {
    %c0_i32 = arith.constant 0 : i32
    %c0_i32_0 = arith.constant 0 : i32
    return %arg0, %c0_i32 : i32, i32
  }
  func.func @transform_2(%arg0: i32) -> (i32, i32) {
    %c0_i32 = arith.constant 0 : i32
    %c0_i32_0 = arith.constant 0 : i32
    return %arg0, %c0_i32 : i32, i32
  }
}

</mosaic_0001>

<llo_original>
// kernel: tpu_custom_call.1
$region0: #{tpu_custom_call.1}
  #allocation0 [shape = 'u32[]', space=smem, size = 0x4, offset = 0x4, fixed_abs, tag = 'smem constant byte address 0x4 - core index']
  #allocation1 [shape = 'u32[144,128]{1,0:T(1,128)}', space=vmem, size = 0x12000, scoped, tag = 'internal scratch']
  %s0 = inlined_call_operand.hbm [shape: f32[16,128], index: 0, kind: input, shape index: {}]
  %s1 = inlined_call_operand.hbm [shape: f32[16,128], index: 1, kind: input, shape index: {}]
  %s2 = inlined_call_operand.hbm [shape: f32[16,128], index: 2, kind: output, shape index: {}]
  %s3 = sld [smem:[#allocation0]]
  $region26: #{tpu_custom_call.1} parent=0
    _
  %s5 = ssub.s32 1, %s3
  %s6 = scalar_select 0, %s5, %s3
  $region1: #{tpu_custom_call.1} parent=0
    #allocation2 [shape = 'u8[8192]{0}', space=vmem, size = 0x2000, scoped, tag = 'input window, operand 0, single buffered']
    #allocation3 [shape = 's32[1]{0}', space=sflag, size = 0x4, scoped, tag = 'scoped memory for tpu_custom_call.1']
    #allocation4 [shape = 's32[1]{0}', space=sflag, size = 0x4, scoped, tag = 'scoped memory for tpu_custom_call.1']
    #allocation5 [shape = 'u8[8192]{0}', space=vmem, size = 0x2000, scoped, tag = 'input window, operand 1, single buffered']
    #allocation6 [shape = 's32[1]{0}', space=sflag, size = 0x4, scoped, tag = 'scoped memory for tpu_custom_call.1']
    #allocation7 [shape = 'u8[8192]{0}', space=vmem, size = 0x2000, scoped, tag = 'output window, operand 0, single buffered']
    %7 = vsyncpa [#allocation3], 0
    %8 = vsyncpa [#allocation6], 0
    %9 = vsyncpa [#allocation4], 0
    // Predicated region
    $region2: #{tpu_custom_call.1} parent=1 // pred_check
      _
    $region3: #{tpu_custom_call.1} parent=1 // pred_check_branch
      %11 = sbr.rel (0) target = $region5
    $region4: #{tpu_custom_call.1} parent=1 // pred_region
      %s13 = ssub.s32 256, 256
      %14 = vsyncadd [#allocation3], %s13
      %s15 = sshll.u32 [#allocation2], 4
      %s16 = int_to_ptr.vmem [resolvable:$true] %s15
      %21 = dma.hbm_to_vmem [thread:$0]  %s0, 256, %s16, [#allocation3], 128, 128, 8
    $region5: #{tpu_custom_call.1} parent=1 // pred_fallthru
      _
    // Predicated region
    $region6: #{tpu_custom_call.1} parent=1 // pred_check
      _
    $region7: #{tpu_custom_call.1} parent=1 // pred_check_branch
      %23 = sbr.rel (0) target = $region9
    $region8: #{tpu_custom_call.1} parent=1 // pred_region
      %s25 = ssub.s32 256, 256
      %26 = vsyncadd [#allocation6], %s25
      %s27 = sshll.u32 [#allocation5], 4
      %s28 = int_to_ptr.vmem [resolvable:$true] %s27
      %33 = dma.hbm_to_vmem [thread:$0]  %s1, 256, %s28, [#allocation6], 128, 128, 8
    $region9: #{tpu_custom_call.1} parent=1 // pred_fallthru
      _
    // Predicated region
    $region10: #{tpu_custom_call.1} parent=1 // pred_check
      _
    $region11: #{tpu_custom_call.1} parent=1 // pred_check_branch
      %35 = sbr.rel (0) target = $region13
    $region12: #{tpu_custom_call.1} parent=1 // pred_region
      %36 = dma.done [#allocation3], 256
    $region13: #{tpu_custom_call.1} parent=1 // pred_fallthru
      _
    // Predicated region
    $region14: #{tpu_custom_call.1} parent=1 // pred_check
      _
    $region15: #{tpu_custom_call.1} parent=1 // pred_check_branch
      %38 = sbr.rel (0) target = $region17
    $region16: #{tpu_custom_call.1} parent=1 // pred_region
      %39 = dma.done [#allocation6], 256
    $region17: #{tpu_custom_call.1} parent=1 // pred_fallthru
      _
    %v40 = vld [vmem:[#allocation5] sm:$0xff]
    %v41 = vld [vmem:[#allocation5 + $0x8] sm:$0xff]
    %v42 = vld [vmem:[#allocation2] sm:$0xff]
    %v43 = vld [vmem:[#allocation2 + $0x8] sm:$0xff]
    %v44 = vsub.f32 %v40, %v42
    %v45 = vsub.f32 %v41, %v43
    %v46 = vsub.f32 %v44, %v44
    %v47 = vsub.f32 %v45, %v45
    %48 = vst [vmem:[#allocation7] sm:$0xff] %v46
    %49 = vst [vmem:[#allocation7 + $0x8] sm:$0xff] %v47
    // Predicated region
    $region18: #{tpu_custom_call.1} parent=1 // pred_check
      _
    $region19: #{tpu_custom_call.1} parent=1 // pred_check_branch
      %51 = sbr.rel (0) target = $region21
    $region20: #{tpu_custom_call.1} parent=1 // pred_region
      %s53 = ssub.s32 256, 256
      %54 = vsyncadd [#allocation4], %s53
      %s55 = sshll.u32 [#allocation7], 4
      %s56 = int_to_ptr.vmem [resolvable:$true] %s55
      %61 = dma.vmem_to_hbm [thread:$0]  %s56, 256, %s2, [#allocation4], 128, 128, 8
    $region21: #{tpu_custom_call.1} parent=1 // pred_fallthru
      _
    // Predicated region
    $region22: #{tpu_custom_call.1} parent=1 // pred_check
      _
    $region23: #{tpu_custom_call.1} parent=1 // pred_check_branch
      %63 = sbr.rel (0) target = $region25
    $region24: #{tpu_custom_call.1} parent=1 // pred_region
      %64 = dma.done [#allocation4], 256
    $region25: #{tpu_custom_call.1} parent=1 // pred_fallthru
      _
    %65 = vsyncpa [#allocation3], 1
    %66 = vsyncpa [#allocation6], 1
    %67 = vsyncpa [#allocation4], 1

</llo_original>
